<compile_context>
chip_gen: v6e
topology: v6e:2x2x1
jax: 0.10.0
libtpu: 0.0.40
codegen_flags: <defaults>
</compile_context>

<pallas_src>
import jax
import jax.numpy as jnp
from jax import lax
from jax.experimental import pallas as pl
from jax.experimental.pallas import tpu as pltpu


def _round_up(x, m):
    return ((x + m - 1) // m) * m


# ---------------------------------------------------------------------------
# Kernel 1: fused query/key projection (bias folded via ones column).
#   q = x @ Wq + bq ;  k = y @ Wk + bk       (single pass over batch tiles)
# ---------------------------------------------------------------------------
def _proj_kernel(x_ref, y_ref, wq_ref, wk_ref, q_ref, k_ref):
    q = lax.dot_general(
        x_ref[...], wq_ref[...],
        dimension_numbers=(((1,), (0,)), ((), ())),
        preferred_element_type=jnp.float32)
    k = lax.dot_general(
        y_ref[...], wk_ref[...],
        dimension_numbers=(((1,), (0,)), ((), ())),
        preferred_element_type=jnp.float32)
    q_ref[...] = q.astype(q_ref.dtype)
    k_ref[...] = k.astype(k_ref.dtype)


# ---------------------------------------------------------------------------
# Kernel 2: attention tile = sigmoid(q_tile @ k_tile^T), written at true shape.
# sigmoid(x) = 0.5 * tanh(0.5 * x) + 0.5  -> single EUP transcendental.
# ---------------------------------------------------------------------------
def _attn_kernel(q_ref, k_ref, o_ref):
    att = lax.dot_general(
        q_ref[...], k_ref[...],
        dimension_numbers=(((1,), (1,)), ((), ())),   # contract feature dims
        preferred_element_type=jnp.float32)
    o_ref[...] = (0.5 * jnp.tanh(0.5 * att) + 0.5).astype(o_ref.dtype)


def attention_forward(x, y, wq, bq, wk, bk, *, tm=512, tn=512, tp=512,
                      compute_dtype=jnp.bfloat16, out_dtype=jnp.float32):
    """x, y: (B, F); wq/wk: (F, D) (pre-transposed); bq/bk: (D,) -> (B, B)."""
    B, F = x.shape
    D = wq.shape[1]
    LANE = 128

    # Minimal padding: feature axis to F+1 (ones column -> folded bias),
    # rounded up to a sublane multiple; projection output axis to 128 lanes.
    Fp = _round_up(F + 1, 8)
    Dp = _round_up(D, LANE)
    itemsize = jnp.dtype(compute_dtype).itemsize

    wq_p = jnp.zeros((Fp, Dp), compute_dtype)
    wq_p = wq_p.at[:F, :D].set(wq.astype(compute_dtype))
    wq_p = wq_p.at[F, :D].set(bq.astype(compute_dtype))      # bias row
    wk_p = jnp.zeros((Fp, Dp), compute_dtype)
    wk_p = wk_p.at[:F, :D].set(wk.astype(compute_dtype))
    wk_p = wk_p.at[F, :D].set(bk.astype(compute_dtype))

    x_p = jnp.zeros((B, Fp), compute_dtype).at[:, :F].set(x.astype(compute_dtype))
    x_p = x_p.at[:, F].set(1.0)                               # ones column
    y_p = jnp.zeros((B, Fp), compute_dtype).at[:, :F].set(y.astype(compute_dtype))
    y_p = y_p.at[:, F].set(1.0)

    # Tiles: multiples of (8, 128) or exactly the full batch dim (small B).
    tp = B if B < tp else tp
    tm = B if B < tm else tm
    tn = B if B < tn else tn

    # ---- Pass 1: projections (tiny GEMMs, done exactly once) ----
    q, k = pl.pallas_call(
        _proj_kernel,
        out_shape=(jax.ShapeDtypeStruct((B, Dp), compute_dtype),
                   jax.ShapeDtypeStruct((B, Dp), compute_dtype)),
        grid=(pl.cdiv(B, tp),),
        in_specs=[
            pl.BlockSpec((tp, Fp), lambda i: (i, 0)),   # x batch tile
            pl.BlockSpec((tp, Fp), lambda i: (i, 0)),   # y batch tile
            pl.BlockSpec((Fp, Dp), lambda i: (0, 0)),   # Wq (+ bias row)
            pl.BlockSpec((Fp, Dp), lambda i: (0, 0)),   # Wk (+ bias row)
        ],
        out_specs=(pl.BlockSpec((tp, Dp), lambda i: (i, 0)),
                   pl.BlockSpec((tp, Dp), lambda i: (i, 0))),
        compiler_params=pltpu.CompilerParams(
            dimension_semantics=("parallel",)),
        cost_estimate=pl.CostEstimate(
            flops=4 * B * Fp * Dp,
            transcendentals=0,
            bytes_accessed=itemsize * (2 * B * Fp + 2 * Fp * Dp + 2 * B * Dp)),
    )(x_p, y_p, wq_p, wk_p)

    # ---- Pass 2: sigmoid(q @ k^T), true-shape (B, B) output ----
    grid = (pl.cdiv(B, tm), pl.cdiv(B, tn))
    out = pl.pallas_call(
        _attn_kernel,
        out_shape=jax.ShapeDtypeStruct((B, B), out_dtype),
        grid=grid,
        in_specs=[
            pl.BlockSpec((tm, Dp), lambda i, j: (i, 0)),   # q row tile
            pl.BlockSpec((tn, Dp), lambda i, j: (j, 0)),   # k key tile
        ],
        out_specs=pl.BlockSpec((tm, tn), lambda i, j: (i, j)),
        compiler_params=pltpu.CompilerParams(
            dimension_semantics=("parallel", "parallel")),
        cost_estimate=pl.CostEstimate(
            flops=2 * B * B * Dp,
            transcendentals=B * B,
            bytes_accessed=itemsize * (B * Dp + grid[0] * B * Dp)
            + jnp.dtype(out_dtype).itemsize * B * B),
    )(q, k)
    return out


def init_linear_params(key, in_dim, out_dim):
    """Deterministic PyTorch-style Linear init: U(-1/sqrt(in), 1/sqrt(in))."""
    kw, kb = jax.random.split(key)
    bound = 1.0 / (in_dim ** 0.5)
    # Stored already transposed as (in_dim, out_dim) for x @ W.
    w = jax.random.uniform(kw, (in_dim, out_dim), jnp.float32, -bound, bound)
    b = jax.random.uniform(kb, (out_dim,), jnp.float32, -bound, bound)
    return w, b


def _reference(x, y, wq, bq, wk, bk):
    return jax.nn.sigmoid((x @ wq + bq[None, :]) @ (y @ wk + bk[None, :]).T)


if __name__ == "__main__":
    in_dim, out_dim = 31, 31   # module defaults
    key = jax.random.PRNGKey(0)
    kx, ky, kq, kk, kx2, ky2 = jax.random.split(key, 6)

    wq, bq = init_linear_params(kq, in_dim, out_dim)
    wk, bk = init_linear_params(kk, in_dim, out_dim)

    # --- small batch (module's toy size), f32 MXU path ---
    B = 8
    x = jax.random.normal(kx, (B, in_dim), jnp.float32)
    y = jax.random.normal(ky, (B, in_dim), jnp.float32)
    out = jax.block_until_ready(
        attention_forward(x, y, wq, bq, wk, bk, compute_dtype=jnp.float32))
    ref = _reference(x, y, wq, bq, wk, bk)
    assert out.shape == (B, B)
    assert jnp.allclose(out, ref, atol=1e-4, rtol=1e-4)

    # --- larger batch, small tiles: exercises the 3x3 grid + partial edge
    #     tiles of the true-shape (B, B) output, f32 path ---
    B2 = 300
    x2 = jax.random.normal(kx2, (B2, in_dim), jnp.float32)
    y2 = jax.random.normal(ky2, (B2, in_dim), jnp.float32)
    out2 = jax.block_until_ready(
        attention_forward(x2, y2, wq, bq, wk, bk, tm=128, tn=128, tp=128,
                          compute_dtype=jnp.float32))
    ref2 = _reference(x2, y2, wq, bq, wk, bk)
    assert out2.shape == (B2, B2)
    assert jnp.allclose(out2, ref2, atol=1e-4, rtol=1e-4)

    # --- default path: bf16 MXU inputs (f32 accumulation), large tiles ---
    out_bf16 = jax.block_until_ready(attention_forward(x2, y2, wq, bq, wk, bk))
    assert out_bf16.shape == (B2, B2)
    assert jnp.allclose(out_bf16, ref2, atol=3e-2, rtol=3e-2)

    print("KERNEL_OK")
</pallas_src>

<mosaic_0001>
module attributes {stable_mosaic.version = 11 : i64} {
  func.func @_proj_kernel(%arg0: i32, %arg1: memref<8x32xf32, #tpu.memory_space<vmem>>, %arg2: memref<8x32xf32, #tpu.memory_space<vmem>>, %arg3: memref<32x128xf32, #tpu.memory_space<vmem>>, %arg4: memref<32x128xf32, #tpu.memory_space<vmem>>, %arg5: memref<8x128xf32, #tpu.memory_space<vmem>>, %arg6: memref<8x128xf32, #tpu.memory_space<vmem>>) attributes {dimension_semantics = [#tpu.dimension_semantics<parallel>], iteration_bounds = array<i64: 1>, scalar_prefetch = 0 : i64, scratch_operands = 0 : i64, tpu.core_type = #tpu.core_type<tc>, window_params = [{transform_indices = @transform_0, window_bounds = array<i64: 8, 32>}, {transform_indices = @transform_1, window_bounds = array<i64: 8, 32>}, {pipeline_mode = #tpu.pipeline_mode<synchronous>, transform_indices = @transform_2, window_bounds = array<i64: 32, 128>}, {pipeline_mode = #tpu.pipeline_mode<synchronous>, transform_indices = @transform_3, window_bounds = array<i64: 32, 128>}, {transform_indices = @transform_4, window_bounds = array<i64: 8, 128>}, {transform_indices = @transform_5, window_bounds = array<i64: 8, 128>}]} {
    %c0 = arith.constant 0 : index
    %c0_0 = arith.constant 0 : index
    %0 = vector.load %arg1[%c0, %c0_0] : memref<8x32xf32, #tpu.memory_space<vmem>>, vector<8x32xf32>
    %c0_1 = arith.constant 0 : index
    %c0_2 = arith.constant 0 : index
    %1 = vector.load %arg3[%c0_1, %c0_2] : memref<32x128xf32, #tpu.memory_space<vmem>>, vector<32x128xf32>
    %cst = arith.constant dense<0.000000e+00> : vector<8x128xf32>
    %2 = tpu.matmul %0, %1, %cst {dimension_numbers = #tpu.dot_dimension_numbers<[1], [0], [0], [1], [0, 0, 1, 1], [], []>} : vector<8x32xf32>, vector<32x128xf32>, vector<8x128xf32> -> vector<8x128xf32>
    %c0_3 = arith.constant 0 : index
    %c0_4 = arith.constant 0 : index
    %3 = vector.load %arg2[%c0_3, %c0_4] : memref<8x32xf32, #tpu.memory_space<vmem>>, vector<8x32xf32>
    %c0_5 = arith.constant 0 : index
    %c0_6 = arith.constant 0 : index
    %4 = vector.load %arg4[%c0_5, %c0_6] : memref<32x128xf32, #tpu.memory_space<vmem>>, vector<32x128xf32>
    %cst_7 = arith.constant dense<0.000000e+00> : vector<8x128xf32>
    %5 = tpu.matmul %3, %4, %cst_7 {dimension_numbers = #tpu.dot_dimension_numbers<[1], [0], [0], [1], [0, 0, 1, 1], [], []>} : vector<8x32xf32>, vector<32x128xf32>, vector<8x128xf32> -> vector<8x128xf32>
    %c0_8 = arith.constant 0 : index
    %c0_9 = arith.constant 0 : index
    %6 = vector.load %arg5[%c0_8, %c0_9] : memref<8x128xf32, #tpu.memory_space<vmem>>, vector<8x128xf32>
    tpu.vector_store %arg5[%c0_8, %c0_9], %2 {strides = array<i32>} : memref<8x128xf32, #tpu.memory_space<vmem>>, vector<8x128xf32>,
    %c0_10 = arith.constant 0 : index
    %c0_11 = arith.constant 0 : index
    %7 = vector.load %arg6[%c0_10, %c0_11] : memref<8x128xf32, #tpu.memory_space<vmem>>, vector<8x128xf32>
    tpu.vector_store %arg6[%c0_10, %c0_11], %5 {strides = array<i32>} : memref<8x128xf32, #tpu.memory_space<vmem>>, vector<8x128xf32>,
    return
  }
  func.func @transform_0(%arg0: i32) -> (i32, i32) {
    %c0_i32 = arith.constant 0 : i32
    %c0_i32_0 = arith.constant 0 : i32
    return %arg0, %c0_i32 : i32, i32
  }
  func.func @transform_1(%arg0: i32) -> (i32, i32) {
    %c0_i32 = arith.constant 0 : i32
    %c0_i32_0 = arith.constant 0 : i32
    return %arg0, %c0_i32 : i32, i32
  }
  func.func @transform_2(%arg0: i32) -> (i32, i32) {
    %c0_i32 = arith.constant 0 : i32
    %c0_i32_0 = arith.constant 0 : i32
    %c0_i32_1 = arith.constant 0 : i32
    return %c0_i32, %c0_i32_0 : i32, i32
  }
  func.func @transform_3(%arg0: i32) -> (i32, i32) {
    %c0_i32 = arith.constant 0 : i32
    %c0_i32_0 = arith.constant 0 : i32
    %c0_i32_1 = arith.constant 0 : i32
    return %c0_i32, %c0_i32_0 : i32, i32
  }
  func.func @transform_4(%arg0: i32) -> (i32, i32) {
    %c0_i32 = arith.constant 0 : i32
    %c0_i32_0 = arith.constant 0 : i32
    return %arg0, %c0_i32 : i32, i32
  }
  func.func @transform_5(%arg0: i32) -> (i32, i32) {
    %c0_i32 = arith.constant 0 : i32
    %c0_i32_0 = arith.constant 0 : i32
    return %arg0, %c0_i32 : i32, i32
  }
}

</mosaic_0001>

<llo_original>
// kernel: tpu_custom_call.1
$region0: #{tpu_custom_call.1}
  #allocation0 [shape = 'u32[]', space=smem, size = 0x4, offset = 0x4, fixed_abs, tag = 'smem constant byte address 0x4 - core index']
  #allocation1 [shape = 'u32[144,128]{1,0:T(1,128)}', space=vmem, size = 0x12000, scoped, tag = 'internal scratch']
  %s0 = inlined_call_operand.hbm [shape: f32[8,32], index: 0, kind: input, shape index: {}]
  %s1 = inlined_call_operand.hbm [shape: f32[8,32], index: 1, kind: input, shape index: {}]
  %s2 = inlined_call_operand.hbm [shape: f32[32,128], index: 2, kind: input, shape index: {}]
  %s3 = inlined_call_operand.hbm [shape: f32[32,128], index: 3, kind: input, shape index: {}]
  %s4 = inlined_call_operand.hbm [shape: f32[8,128], index: 4, kind: output, shape index: {0}]
  %s5 = inlined_call_operand.hbm [shape: f32[8,128], index: 5, kind: output, shape index: {1}]
  %6 = xla_tuple %s4, %s5
  %s7 = sld [smem:[#allocation0]]
  $region50: #{tpu_custom_call.1} parent=0
    _
  %s9 = ssub.s32 1, %s7
  %s10 = scalar_select 0, %s9, %s7
  $region1: #{tpu_custom_call.1} parent=0
    #allocation2 [shape = 'u8[4096]{0}', space=vmem, size = 0x1000, scoped, tag = 'input window, operand 0, single buffered']
    #allocation3 [shape = 's32[1]{0}', space=sflag, size = 0x4, scoped, tag = 'scoped memory for tpu_custom_call.1']
    #allocation4 [shape = 's32[1]{0}', space=sflag, size = 0x4, scoped, tag = 'scoped memory for tpu_custom_call.1']
    #allocation5 [shape = 'u8[4096]{0}', space=vmem, size = 0x1000, scoped, tag = 'input window, operand 1, single buffered']
    #allocation6 [shape = 's32[1]{0}', space=sflag, size = 0x4, scoped, tag = 'scoped memory for tpu_custom_call.1']
    #allocation7 [shape = 'u8[16384]{0}', space=vmem, size = 0x4000, scoped, tag = 'input window, operand 2, single buffered']
    #allocation8 [shape = 'u8[16384]{0}', space=vmem, size = 0x4000, scoped, tag = 'input window, operand 3, single buffered']
    #allocation9 [shape = 's32[1]{0}', space=sflag, size = 0x4, scoped, tag = 'scoped memory for tpu_custom_call.1']
    #allocation10 [shape = 'u8[4096]{0}', space=vmem, size = 0x1000, scoped, tag = 'output window, operand 0, single buffered']
    #allocation11 [shape = 'u8[4096]{0}', space=vmem, size = 0x1000, scoped, tag = 'output window, operand 1, single buffered']
    #allocation12 [shape = 's32[1]{0}', space=sflag, size = 0x4, scoped, tag = 'scoped memory for tpu_custom_call.1']
    %11 = vsyncpa [#allocation3], 0
    %12 = vsyncpa [#allocation6], 0
    %13 = vsyncpa [#allocation9], 0
    %14 = vsyncpa [#allocation4], 0
    %15 = vsyncpa [#allocation12], 0
    // Predicated region
    $region2: #{tpu_custom_call.1} parent=1 // pred_check
      _
    $region3: #{tpu_custom_call.1} parent=1 // pred_check_branch
      %17 = sbr.rel (0) target = $region5
    $region4: #{tpu_custom_call.1} parent=1 // pred_region
      %s19 = ssub.s32 128, 128
      %20 = vsyncadd [#allocation3], %s19
      %s22 = sshll.u32 [#allocation2], 4
      %s23 = int_to_ptr.vmem [resolvable:$true] %s22
      %25 = dma.hbm_to_vmem [thread:$0]  %s0, 128, %s23, [#allocation3]
    $region5: #{tpu_custom_call.1} parent=1 // pred_fallthru
      _
    // Predicated region
    $region6: #{tpu_custom_call.1} parent=1 // pred_check
      _
    $region7: #{tpu_custom_call.1} parent=1 // pred_check_branch
      %27 = sbr.rel (0) target = $region9
    $region8: #{tpu_custom_call.1} parent=1 // pred_region
      %s29 = ssub.s32 128, 128
      %30 = vsyncadd [#allocation6], %s29
      %s32 = sshll.u32 [#allocation5], 4
      %s33 = int_to_ptr.vmem [resolvable:$true] %s32
      %35 = dma.hbm_to_vmem [thread:$0]  %s1, 128, %s33, [#allocation6]
    $region9: #{tpu_custom_call.1} parent=1 // pred_fallthru
      _
    // Predicated region
    $region10: #{tpu_custom_call.1} parent=1 // pred_check
      _
    $region11: #{tpu_custom_call.1} parent=1 // pred_check_branch
      %37 = sbr.rel (0) target = $region13
    $region12: #{tpu_custom_call.1} parent=1 // pred_region
      %s39 = ssub.s32 512, 512
      %40 = vsyncadd [#allocation6], %s39
      %s41 = sshll.u32 [#allocation7], 4
      %s42 = int_to_ptr.vmem [resolvable:$true] %s41
      %47 = dma.hbm_to_vmem [thread:$0]  %s2, 512, %s42, [#allocation6], 128, 128, 8
    $region13: #{tpu_custom_call.1} parent=1 // pred_fallthru
      _
    // Predicated region
    $region14: #{tpu_custom_call.1} parent=1 // pred_check
      _
    $region15: #{tpu_custom_call.1} parent=1 // pred_check_branch
      %49 = sbr.rel (0) target = $region17
    $region16: #{tpu_custom_call.1} parent=1 // pred_region
      %s51 = ssub.s32 512, 512
      %52 = vsyncadd [#allocation9], %s51
      %s53 = sshll.u32 [#allocation8], 4
      %s54 = int_to_ptr.vmem [resolvable:$true] %s53
      %59 = dma.hbm_to_vmem [thread:$0]  %s3, 512, %s54, [#allocation9], 128, 128, 8
    $region17: #{tpu_custom_call.1} parent=1 // pred_fallthru
      _
    // Predicated region
    $region18: #{tpu_custom_call.1} parent=1 // pred_check
      _
    $region19: #{tpu_custom_call.1} parent=1 // pred_check_branch
      %61 = sbr.rel (0) target = $region21
    $region20: #{tpu_custom_call.1} parent=1 // pred_region
      %62 = dma.done [#allocation3], 128
    $region21: #{tpu_custom_call.1} parent=1 // pred_fallthru
      _
    // Predicated region
    $region22: #{tpu_custom_call.1} parent=1 // pred_check
      _
    $region23: #{tpu_custom_call.1} parent=1 // pred_check_branch
      %64 = sbr.rel (0) target = $region25
    $region24: #{tpu_custom_call.1} parent=1 // pred_region
      %65 = dma.done [#allocation6], 128
    $region25: #{tpu_custom_call.1} parent=1 // pred_fallthru
      _
    // Predicated region
    $region26: #{tpu_custom_call.1} parent=1 // pred_check
      _
    $region27: #{tpu_custom_call.1} parent=1 // pred_check_branch
      %67 = sbr.rel (0) target = $region29
    $region28: #{tpu_custom_call.1} parent=1 // pred_region
      %68 = dma.done [#allocation6], 512
    $region29: #{tpu_custom_call.1} parent=1 // pred_fallthru
      _
    // Predicated region
    $region30: #{tpu_custom_call.1} parent=1 // pred_check
      _
    $region31: #{tpu_custom_call.1} parent=1 // pred_check_branch
      %70 = sbr.rel (0) target = $region33
    $region32: #{tpu_custom_call.1} parent=1 // pred_region
      %71 = dma.done [#allocation9], 512
    $region33: #{tpu_custom_call.1} parent=1 // pred_fallthru
      _
    %v72 = vld [vmem:[#allocation2] sm:$0xff]
    %v73 = vld [vmem:[#allocation7] sm:$0xff]
    %v74 = vld [vmem:[#allocation7 + $0x8] sm:$0xff]
    %v75 = vld [vmem:[#allocation7 + $0x10] sm:$0xff]
    %v76 = vld [vmem:[#allocation7 + $0x18] sm:$0xff]
    %vm77 = vcmask 261120
    %v79 = vsel %vm77, %v72, 0
    %81 = vmatprep.subr.mxu0 0.0
    %82 = vmatpush1.msra.mxu0 0.0
    %83 = vmatprep.subr.mxu0 0.0
    %84 = vmatpush1.msra.mxu0 0.0
    %85 = vmatprep.subr.mxu0 0.0
    %86 = vmatpush1.msra.mxu0 0.0
    %87 = vmatprep.subr.mxu0 0.0
    %88 = vmatpush1.msra.mxu0 0.0
    %89 = vmatprep.subr.mxu0 0.0
    %90 = vmatpush1.msra.mxu0 0.0
    %91 = vmatprep.subr.mxu0 0.0
    %92 = vmatpush1.msra.mxu0 0.0
    %93 = vmatprep.subr.mxu0 0.0
    %94 = vmatpush1.msra.mxu0 0.0
    %95 = vmatprep.subr.mxu0 0.0
    %96 = vmatpush1.msra.mxu0 0.0
    %97 = vmatprep.subr.mxu0 0.0
    %98 = vmatpush1.msra.mxu0 0.0
    %99 = vmatprep.subr.mxu0 0.0
    %100 = vmatpush1.msra.mxu0 0.0
    %101 = vmatprep.subr.mxu0 0.0
    %102 = vmatpush1.msra.mxu0 0.0
    %103 = vmatprep.subr.mxu0 0.0
    %104 = vmatpush1.msra.mxu0 0.0
    %105 = vmatprep.subr.mxu0 0.0
    %106 = vmatpush1.msra.mxu0 %v76
    %107 = vmatprep.subr.mxu0 0.0
    %108 = vmatpush1.msra.mxu0 %v75
    %109 = vmatprep.subr.mxu0 0.0
    %110 = vmatpush1.msra.mxu0 %v74
    %111 = vmatprep.subr.mxu0 0.0
    %112 = vmatpush1.msra.mxu0 %v73
    %113 = vmatprep.subr.mxu0 0.0
    %114 = vmatpush2.msra.mxu0 0.0
    %115 = vmatprep.subr.mxu0 0.0
    %116 = vmatpush2.msra.mxu0 0.0
    %117 = vmatprep.subr.mxu0 0.0
    %118 = vmatpush2.msra.mxu0 0.0
    %119 = vmatprep.subr.mxu0 0.0
    %120 = vmatpush2.msra.mxu0 0.0
    %121 = vmatprep.subr.mxu0 0.0
    %122 = vmatpush2.msra.mxu0 0.0
    %123 = vmatprep.subr.mxu0 0.0
    %124 = vmatpush2.msra.mxu0 0.0
    %125 = vmatprep.subr.mxu0 0.0
    %126 = vmatpush2.msra.mxu0 0.0
    %127 = vmatprep.subr.mxu0 0.0
    %128 = vmatpush2.msra.mxu0 0.0
    %129 = vmatprep.subr.mxu0 0.0
    %130 = vmatpush2.msra.mxu0 0.0
    %131 = vmatprep.subr.mxu0 0.0
    %132 = vmatpush2.msra.mxu0 0.0
    %133 = vmatprep.subr.mxu0 0.0
    %134 = vmatpush2.msra.mxu0 0.0
    %135 = vmatprep.subr.mxu0 0.0
    %136 = vmatpush2.msra.mxu0 0.0
    %137 = vmatprep.subr.mxu0 0.0
    %138 = vmatpush2.msra.mxu0 0.0
    %139 = vmatprep.subr.mxu0 0.0
    %140 = vmatpush2.msra.mxu0 0.0
    %141 = vmatprep.subr.mxu0 0.0
    %142 = vmatpush2.msra.mxu0 0.0
    %143 = vmatprep.subr.mxu0 0.0
    %144 = vmatpush2.msra.mxu0 0.0
    %145 = vmatprep.mubr.f32.mxu0 0.0
    %146 = vmatmul.mubr.f32.gmra.mxu0 %v79
    %v147 = vpop.f32.mrf.mxu0
    %v148 = vadd.f32 0.0, %v147
    %v149 = vpop.f32.mrf.mxu0
    %150 = vdwg.mxu0
    %v151 = vld [vmem:[#allocation5] sm:$0xff]
    %v152 = vld [vmem:[#allocation8] sm:$0xff]
    %v153 = vld [vmem:[#allocation8 + $0x8] sm:$0xff]
    %v154 = vld [vmem:[#allocation8 + $0x10] sm:$0xff]
    %v155 = vld [vmem:[#allocation8 + $0x18] sm:$0xff]
    %v157 = vsel %vm77, %v151, 0
    %159 = vmatprep.subr.mxu0 0.0
    %160 = vmatpush1.msra.mxu0 0.0
    %161 = vmatprep.subr.mxu0 0.0
    %162 = vmatpush1.msra.mxu0 0.0
    %163 = vmatprep.subr.mxu0 0.0
    %164 = vmatpush1.msra.mxu0 0.0
    %165 = vmatprep.subr.mxu0 0.0
    %166 = vmatpush1.msra.mxu0 0.0
    %167 = vmatprep.subr.mxu0 0.0
    %168 = vmatpush1.msra.mxu0 0.0
    %169 = vmatprep.subr.mxu0 0.0
    %170 = vmatpush1.msra.mxu0 0.0
    %171 = vmatprep.subr.mxu0 0.0
    %172 = vmatpush1.msra.mxu0 0.0
    %173 = vmatprep.subr.mxu0 0.0
    %174 = vmatpush1.msra.mxu0 0.0
    %175 = vmatprep.subr.mxu0 0.0
    %176 = vmatpush1.msra.mxu0 0.0
    %177 = vmatprep.subr.mxu0 0.0
    %178 = vmatpush1.msra.mxu0 0.0
    %179 = vmatprep.subr.mxu0 0.0
    %180 = vmatpush1.msra.mxu0 0.0
    %181 = vmatprep.subr.mxu0 0.0
    %182 = vmatpush1.msra.mxu0 0.0
    %183 = vmatprep.subr.mxu0 0.0
    %184 = vmatpush1.msra.mxu0 %v155
    %185 = vmatprep.subr.mxu0 0.0
    %186 = vmatpush1.msra.mxu0 %v154
    %187 = vmatprep.subr.mxu0 0.0
    %188 = vmatpush1.msra.mxu0 %v153
    %189 = vmatprep.subr.mxu0 0.0
    %190 = vmatpush1.msra.mxu0 %v152
    %191 = vmatprep.subr.mxu0 0.0
    %192 = vmatpush2.msra.mxu0 0.0
    %193 = vmatprep.subr.mxu0 0.0
    %194 = vmatpush2.msra.mxu0 0.0
    %195 = vmatprep.subr.mxu0 0.0
    %196 = vmatpush2.msra.mxu0 0.0
    %197 = vmatprep.subr.mxu0 0.0
    %198 = vmatpush2.msra.mxu0 0.0
    %199 = vmatprep.subr.mxu0 0.0
    %200 = vmatpush2.msra.mxu0 0.0
    %201 = vmatprep.subr.mxu0 0.0
    %202 = vmatpush2.msra.mxu0 0.0
    %203 = vmatprep.subr.mxu0 0.0
    %204 = vmatpush2.msra.mxu0 0.0
    %205 = vmatprep.subr.mxu0 0.0
    %206 = vmatpush2.msra.mxu0 0.0
    %207 = vmatprep.subr.mxu0 0.0
    %208 = vmatpush2.msra.mxu0 0.0
    %209 = vmatprep.subr.mxu0 0.0
    %210 = vmatpush2.msra.mxu0 0.0
    %211 = vmatprep.subr.mxu0 0.0
    %212 = vmatpush2.msra.mxu0 0.0
    %213 = vmatprep.subr.mxu0 0.0
    %214 = vmatpush2.msra.mxu0 0.0
    %215 = vmatprep.subr.mxu0 0.0
    %216 = vmatpush2.msra.mxu0 0.0
    %217 = vmatprep.subr.mxu0 0.0
    %218 = vmatpush2.msra.mxu0 0.0
    %219 = vmatprep.subr.mxu0 0.0
    %220 = vmatpush2.msra.mxu0 0.0
    %221 = vmatprep.subr.mxu0 0.0
    %222 = vmatpush2.msra.mxu0 0.0
    %223 = vmatprep.mubr.f32.mxu0 0.0
    %224 = vmatmul.mubr.f32.gmra.mxu0 %v157
    %v225 = vpop.f32.mrf.mxu0
    %v226 = vadd.f32 0.0, %v225
    %v227 = vpop.f32.mrf.mxu0
    %228 = vdwg.mxu0
    %229 = vst [vmem:[#allocation10] sm:$0xff] %v148
    %230 = vst [vmem:[#allocation11] sm:$0xff] %v226
    // Predicated region
    $region34: #{tpu_custom_call.1} parent=1 // pred_check
      _
    $region35: #{tpu_custom_call.1} parent=1 // pred_check_branch
      %232 = sbr.rel (0) target = $region37
    $region36: #{tpu_custom_call.1} parent=1 // pred_region
      %s234 = ssub.s32 128, 128
      %235 = vsyncadd [#allocation4], %s234
      %s237 = sshll.u32 [#allocation10], 4
      %s238 = int_to_ptr.vmem [resolvable:$true] %s237
      %240 = dma.vmem_to_hbm [thread:$0]  %s238, 128, %s4, [#allocation4]
    $region37: #{tpu_custom_call.1} parent=1 // pred_fallthru
      _
    // Predicated region
    $region38: #{tpu_custom_call.1} parent=1 // pred_check
      _
    $region39: #{tpu_custom_call.1} parent=1 // pred_check_branch
      %242 = sbr.rel (0) target = $region41
    $region40: #{tpu_custom_call.1} parent=1 // pred_region
      %s244 = ssub.s32 128, 128
      %245 = vsyncadd [#allocation12], %s244
      %s247 = sshll.u32 [#allocation11], 4
      %s248 = int_to_ptr.vmem [resolvable:$true] %s247
      %250 = dma.vmem_to_hbm [thread:$0]  %s248, 128, %s5, [#allocation12]
    $region41: #{tpu_custom_call.1} parent=1 // pred_fallthru
      _
    // Predicated region
    $region42: #{tpu_custom_call.1} parent=1 // pred_check
      _
    $region43: #{tpu_custom_call.1} parent=1 // pred_check_branch
      %252 = sbr.rel (0) target = $region45
    $region44: #{tpu_custom_call.1} parent=1 // pred_region
      %253 = dma.done [#allocation4], 128
    $region45: #{tpu_custom_call.1} parent=1 // pred_fallthru
      _
    // Predicated region
    $region46: #{tpu_custom_call.1} parent=1 // pred_check
      _
    $region47: #{tpu_custom_call.1} parent=1 // pred_check_branch
      %255 = sbr.rel (0) target = $region49
    $region48: #{tpu_custom_call.1} parent=1 // pred_region
      %256 = dma.done [#allocation12], 128
    $region49: #{tpu_custom_call.1} parent=1 // pred_fallthru
      _
    %257 = vsyncpa [#allocation3], 1
    %258 = vsyncpa [#allocation6], 1
    %259 = vsyncpa [#allocation9], 1
    %260 = vsyncpa [#allocation4], 1
    %261 = vsyncpa [#allocation12], 1

</llo_original>
